<compile_context>
chip_gen: v7x
topology: tpu7x:2x2x1
jax: 0.10.0
libtpu: 0.0.40
codegen_flags: <defaults>
</compile_context>

<pallas_src>
import jax
import jax.numpy as jnp
from jax import lax
from jax.experimental import pallas as pl
from jax.experimental.pallas import tpu as pltpu

_BIG = 1.0e30  # finite "infinity" stand-in (safe under f32 arithmetic)


def _round_up(x, m):
    return ((x + m - 1) // m) * m


def _cce_kernel(x_ref, p_ref, side_ref, tgt_ref, mt_ref, mw_ref):
    """Grid = (batch tile i [parallel], prototype-column tile j [reduction]).

    Outputs mt/mw are per-row running mins of (||p||^2/2 - x.p) over target /
    wrong prototype columns; they are resident across the j (reduction) axis
    because their BlockSpec index does not depend on j.
    """
    # NOTE: program_id only at the top level of the kernel (never inside a
    # pl.when body) -- required for the interpret/lowering path.
    cp_idx = pl.program_id(1)

    @pl.when(cp_idx == 0)
    def _():
        mt_ref[...] = jnp.full_like(mt_ref, _BIG)
        mw_ref[...] = jnp.full_like(mw_ref, _BIG)

    x = x_ref[...]                                    # (b_tile, F_pad)  mm dtype
    p = p_ref[...]                                    # (cp_tile, F_pad) mm dtype
    # MXU: g = x @ p^T  (contraction over the feature/lane axis, f32 accumulate)
    g = lax.dot_general(x, p,
                        dimension_numbers=(((1,), (1,)), ((), ())),
                        preferred_element_type=jnp.float32)   # (b_tile, cp_tile)

    h = side_ref[0:1, :] - g                          # ||p||^2/2 - x.p
    is_target = side_ref[1:2, :] == tgt_ref[...]      # (b_tile, cp_tile) bool

    m_t = jnp.min(jnp.where(is_target, h, _BIG), axis=-1, keepdims=True)
    m_w = jnp.min(jnp.where(is_target, _BIG, h), axis=-1, keepdims=True)
    mt_ref[...] = jnp.minimum(mt_ref[...], m_t)
    mw_ref[...] = jnp.minimum(mw_ref[...], m_w)


def cce_loss_pallas(outputs, prototypes, target_classes, *,
                    alpha=5.0, eps=1e-8,
                    b_tile=512, cp_tile=1024,
                    matmul_dtype=jnp.bfloat16,
                    vmem_budget_bytes=28 * 2**20):
    """outputs: (B, F) float, prototypes: (C, P, F) float, target_classes: (B,) int."""
    B, F = outputs.shape
    C, P, F2 = prototypes.shape
    assert F == F2
    CP = C * P
    mm_item = jnp.dtype(matmul_dtype).itemsize

    # ---- tile / padding geometry ------------------------------------------
    F_pad = _round_up(F, 128)
    B8 = _round_up(B, 8)
    CP128 = _round_up(CP, 128)
    cp_gran = 256 if CP128 >= 256 else 128            # MXU-width friendly tiles

    b_max = max(8, min(_round_up(b_tile, 8), B8))
    cp_max = max(cp_gran, min(_round_up(cp_tile, cp_gran),
                              _round_up(CP128, cp_gran)))

    def vmem_est(bt, ct):
        # double-buffered input/output blocks + ~3 (bt, ct) f32 live temporaries
        return (2 * (bt * F_pad * mm_item            # x block
                     + ct * F_pad * mm_item          # prototype block
                     + 8 * ct * 4                    # (2, ct) side block (8-sublane pad)
                     + bt * 128 * 4                  # target block (lane pad)
                     + 2 * bt * 128 * 4)             # two output blocks (lane pad)
                + 3 * bt * ct * 4)

    # Shrink tiles (cp first, then b) to fit the VMEM budget (v7x: 64 MiB total).
    while vmem_est(b_max, cp_max) > vmem_budget_bytes and cp_max > cp_gran:
        cp_max = max(cp_gran, _round_up(cp_max // 2, cp_gran))
    while vmem_est(b_max, cp_max) > vmem_budget_bytes and b_max > 128:
        b_max = max(128, _round_up(b_max // 2, 8))

    n_b = pl.cdiv(B8, b_max)
    b_tile = _round_up(pl.cdiv(B8, n_b), 8)
    B_pad = n_b * b_tile
    n_cp = pl.cdiv(CP128, cp_max)
    cp_tile = _round_up(pl.cdiv(CP128, n_cp), cp_gran)
    CP_pad = n_cp * cp_tile
    # TODO(synk): on v7x with n_b == 1 (small batch) the CP axis could be split
    # across the two TensorCores as a second parallel axis (per-core partial
    # mins combined in the wrapper); not implemented here.

    # ---- padded operands (zero feature padding is exact) -------------------
    outputs_f32 = outputs.astype(jnp.float32)
    x_mm = jnp.zeros((B_pad, F_pad), matmul_dtype).at[:B, :F].set(
        outputs_f32.astype(matmul_dtype))
    # ||x||^2 from the same rounded values as the MXU cross term (consistency).
    x_sq = jnp.sum(jnp.square(x_mm.astype(jnp.float32)), axis=-1)     # (B_pad,)

    protos_f32 = prototypes.reshape(CP, F).astype(jnp.float32)
    p_mm = jnp.zeros((CP_pad, F_pad), matmul_dtype).at[:CP, :F].set(
        protos_f32.astype(matmul_dtype))
    p_sq_half = 0.5 * jnp.sum(jnp.square(p_mm.astype(jnp.float32)), axis=-1)
    col_valid = jnp.arange(CP_pad) < CP
    p_sq_half = jnp.where(col_valid, p_sq_half, _BIG)   # padded cols never win
    cls = jnp.where(col_valid,
                    (jnp.arange(CP_pad) // P).astype(jnp.float32), -1.0)
    side = jnp.stack([p_sq_half, cls], axis=0).astype(jnp.float32)    # (2, CP_pad)

    tgt = jnp.zeros((B_pad, 1), jnp.float32).at[:B, 0].set(
        target_classes.astype(jnp.float32))

    # ---- pallas_call --------------------------------------------------------
    grid_spec = pltpu.PrefetchScalarGridSpec(
        num_scalar_prefetch=0,
        grid=(n_b, n_cp),
        in_specs=[
            pl.BlockSpec((b_tile, F_pad), lambda i, j: (i, 0)),    # x (resident per i)
            pl.BlockSpec((cp_tile, F_pad), lambda i, j: (j, 0)),   # prototypes (streamed)
            pl.BlockSpec((2, cp_tile), lambda i, j: (0, j)),       # ||p||^2/2 + class id
            pl.BlockSpec((b_tile, 1), lambda i, j: (i, 0)),        # target class
        ],
        out_specs=[
            pl.BlockSpec((b_tile, 1), lambda i, j: (i, 0)),        # running min (target)
            pl.BlockSpec((b_tile, 1), lambda i, j: (i, 0)),        # running min (wrong)
        ],
    )

    vmem_limit = int(min(48 * 2**20,
                         max(16 * 2**20, vmem_est(b_tile, cp_tile) * 5 // 4)))

    cost = pl.CostEstimate(
        flops=2 * B_pad * CP_pad * F_pad,
        transcendentals=0,
        bytes_accessed=(B_pad * F_pad * mm_item            # x read once
                        + n_b * CP_pad * F_pad * mm_item   # protos per batch tile
                        + n_b * 2 * CP_pad * 4             # side per batch tile
                        + B_pad * 4                        # targets
                        + 2 * B_pad * 4))                  # outputs

    m_t, m_w = pl.pallas_call(
        _cce_kernel,
        out_shape=(jax.ShapeDtypeStruct((B_pad, 1), jnp.float32),
                   jax.ShapeDtypeStruct((B_pad, 1), jnp.float32)),
        grid_spec=grid_spec,
        compiler_params=pltpu.CompilerParams(
            dimension_semantics=("parallel", "arbitrary"),
            vmem_limit_bytes=vmem_limit),
        cost_estimate=cost,
    )(x_mm, p_mm, side, tgt)

    # ---- tiny wrapper epilogue (after full per-row mins) --------------------
    # d2 = ||x - p||^2 = 2 * min(||p||^2/2 - x.p) + ||x||^2, clamped at 0.
    x_sq_b = x_sq[:B]
    d2_t = jnp.maximum(2.0 * m_t[:B, 0] + x_sq_b, 0.0)
    d2_w = jnp.maximum(2.0 * m_w[:B, 0] + x_sq_b, 0.0)
    denom = jnp.float32(B * F)
    target_loss = jnp.sum(d2_t) / denom
    non_target_loss = jnp.sum(d2_w) / denom
    # Note: for C == 1 (no wrong class) non_target_loss ~ _BIG/(B*F) and the
    # alpha term ~ 0; the PyTorch reference is ill-defined in that edge case.
    return (1.0 - alpha) * target_loss + alpha / (non_target_loss + eps)


def cce_loss_ref(outputs, prototypes, target_classes, *, alpha=5.0, eps=1e-8):
    """Pure-JAX mirror of the PyTorch forward (explicit argmin + gather + MSE)."""
    B, F = outputs.shape
    C, P, _ = prototypes.shape
    diff = outputs[:, None, None, :] - prototypes[None, :, :, :]          # (B, C, P, F)
    dist = jnp.sqrt(jnp.sum(diff * diff, axis=-1))                        # (B, C, P)
    min_dis = jnp.min(dist, axis=-1)                                      # (B, C)
    min_idx = jnp.argmin(dist, axis=-1)                                   # (B, C)
    rows = jnp.arange(B)
    actual_idx = min_idx[rows, target_classes]
    masked = min_dis.at[rows, target_classes].set(jnp.inf)
    wrong_class = jnp.argmin(masked, axis=-1)
    wrong_idx = min_idx[rows, wrong_class]
    actual_protos = prototypes[target_classes, actual_idx]                # (B, F)
    wrong_protos = prototypes[wrong_class, wrong_idx]                     # (B, F)
    target_loss = jnp.mean((outputs - actual_protos) ** 2)
    non_target_loss = jnp.mean((outputs - wrong_protos) ** 2)
    return (1.0 - alpha) * target_loss + alpha / (non_target_loss + eps)


if __name__ == "__main__":
    B, F, C, P = 8, 32, 4, 8  # batch, features, classes, prototypes-per-class
    key = jax.random.PRNGKey(0)
    k_out, k_proto, k_tgt = jax.random.split(key, 3)

    outputs = jax.random.normal(k_out, (B, F), dtype=jnp.float32)
    prototypes = jax.random.normal(k_proto, (C, P, F), dtype=jnp.float32)
    target_classes = jax.random.randint(k_tgt, (B,), 0, C, dtype=jnp.int32)

    ref = cce_loss_ref(outputs, prototypes, target_classes)

    # Exact path (f32 MXU operands): tight tolerance vs the reference.
    loss_f32 = cce_loss_pallas(outputs, prototypes, target_classes,
                               matmul_dtype=jnp.float32)
    jax.block_until_ready(loss_f32)
    assert jnp.allclose(loss_f32, ref, rtol=1e-3, atol=1e-3), (loss_f32, ref)

    # Fast path (bf16 MXU operands, f32 norms/accumulation): looser tolerance.
    loss_bf16 = cce_loss_pallas(outputs, prototypes, target_classes)
    jax.block_until_ready(loss_bf16)
    assert jnp.allclose(loss_bf16, ref, rtol=5e-2, atol=5e-2), (loss_bf16, ref)

    print("KERNEL_OK")
</pallas_src>

<mosaic_0001>
module attributes {stable_mosaic.version = 11 : i64} {
  func.func @_cce_kernel(%arg0: i32, %arg1: i32, %arg2: memref<8x128xf32, #tpu.memory_space<vmem>>, %arg3: memref<128x128xf32, #tpu.memory_space<vmem>>, %arg4: memref<2x128xf32, #tpu.memory_space<vmem>>, %arg5: memref<8x1xf32, #tpu.memory_space<vmem>>, %arg6: memref<8x1xf32, #tpu.memory_space<vmem>>, %arg7: memref<8x1xf32, #tpu.memory_space<vmem>>) attributes {dimension_semantics = [#tpu.dimension_semantics<parallel>, #tpu.dimension_semantics<arbitrary>], iteration_bounds = array<i64: 1, 1>, scalar_prefetch = 0 : i64, scratch_operands = 0 : i64, tpu.core_type = #tpu.core_type<tc>, window_params = [{transform_indices = @transform_0, window_bounds = array<i64: 8, 128>}, {transform_indices = @transform_1, window_bounds = array<i64: 128, 128>}, {transform_indices = @transform_2, window_bounds = array<i64: 2, 128>}, {transform_indices = @transform_3, window_bounds = array<i64: 8, 1>}, {transform_indices = @transform_4, window_bounds = array<i64: 8, 1>}, {transform_indices = @transform_5, window_bounds = array<i64: 8, 1>}]} {
    %c0_i32 = arith.constant 0 : i32
    %0 = arith.cmpi eq, %arg1, %c0_i32 : i32
    %1 = arith.extui %0 : i1 to i32
    %c0_i32_0 = arith.constant 0 : i32
    %2 = arith.cmpi ne, %1, %c0_i32_0 : i32
    scf.if %2 {
      %cst_21 = arith.constant 1.000000e+30 : f32
      %28 = vector.broadcast %cst_21 : f32 to vector<8x1xf32>
      %c0_22 = arith.constant 0 : index
      %c0_23 = arith.constant 0 : index
      %29 = vector.load %arg6[%c0_22, %c0_23] : memref<8x1xf32, #tpu.memory_space<vmem>>, vector<8x1xf32>
      tpu.vector_store %arg6[%c0_22, %c0_23], %28 {strides = array<i32>} : memref<8x1xf32, #tpu.memory_space<vmem>>, vector<8x1xf32>,
      %cst_24 = arith.constant 1.000000e+30 : f32
      %30 = vector.broadcast %cst_24 : f32 to vector<8x1xf32>
      %c0_25 = arith.constant 0 : index
      %c0_26 = arith.constant 0 : index
      %31 = vector.load %arg7[%c0_25, %c0_26] : memref<8x1xf32, #tpu.memory_space<vmem>>, vector<8x1xf32>
      tpu.vector_store %arg7[%c0_25, %c0_26], %30 {strides = array<i32>} : memref<8x1xf32, #tpu.memory_space<vmem>>, vector<8x1xf32>,
    } else {
    }
    %c0 = arith.constant 0 : index
    %c0_1 = arith.constant 0 : index
    %3 = vector.load %arg2[%c0, %c0_1] : memref<8x128xf32, #tpu.memory_space<vmem>>, vector<8x128xf32>
    %c0_2 = arith.constant 0 : index
    %c0_3 = arith.constant 0 : index
    %4 = vector.load %arg3[%c0_2, %c0_3] : memref<128x128xf32, #tpu.memory_space<vmem>>, vector<128x128xf32>
    %cst = arith.constant dense<0.000000e+00> : vector<8x128xf32>
    %5 = tpu.matmul %3, %4, %cst {dimension_numbers = #tpu.dot_dimension_numbers<[1], [1], [0], [0], [0, 0, 1, 0], [], []>} : vector<8x128xf32>, vector<128x128xf32>, vector<8x128xf32> -> vector<8x128xf32>
    %c0_4 = arith.constant 0 : index
    %c0_5 = arith.constant 0 : index
    %6 = vector.load %arg4[%c0_4, %c0_5] : memref<2x128xf32, #tpu.memory_space<vmem>>, vector<1x128xf32>
    %7 = vector.broadcast %6 : vector<1x128xf32> to vector<8x128xf32>
    %8 = arith.subf %7, %5 : vector<8x128xf32>
    %c1 = arith.constant 1 : index
    %c0_6 = arith.constant 0 : index
    %9 = vector.load %arg4[%c1, %c0_6] : memref<2x128xf32, #tpu.memory_space<vmem>>, vector<1x128xf32>
    %c0_7 = arith.constant 0 : index
    %c0_8 = arith.constant 0 : index
    %10 = vector.load %arg5[%c0_7, %c0_8] : memref<8x1xf32, #tpu.memory_space<vmem>>, vector<8x1xf32>
    %11 = vector.broadcast %9 : vector<1x128xf32> to vector<8x128xf32>
    %12 = vector.broadcast %10 : vector<8x1xf32> to vector<8x128xf32>
    %13 = arith.cmpf oeq, %11, %12 : vector<8x128xf32>
    %cst_9 = arith.constant 1.000000e+30 : f32
    %14 = vector.broadcast %cst_9 : f32 to vector<8x128xf32>
    %15 = arith.select %13, %8, %14 : vector<8x128xi1>, vector<8x128xf32>
    %cst_10 = arith.constant dense<0x7F800000> : vector<8xf32>
    %16 = vector.multi_reduction <minimumf>, %15, %cst_10 [1] : vector<8x128xf32> to vector<8xf32>
    %17 = vector.shape_cast %16 : vector<8xf32> to vector<8x1xf32>
    %cst_11 = arith.constant 1.000000e+30 : f32
    %18 = vector.broadcast %cst_11 : f32 to vector<8x128xf32>
    %19 = arith.select %13, %18, %8 : vector<8x128xi1>, vector<8x128xf32>
    %cst_12 = arith.constant dense<0x7F800000> : vector<8xf32>
    %20 = vector.multi_reduction <minimumf>, %19, %cst_12 [1] : vector<8x128xf32> to vector<8xf32>
    %21 = vector.shape_cast %20 : vector<8xf32> to vector<8x1xf32>
    %c0_13 = arith.constant 0 : index
    %c0_14 = arith.constant 0 : index
    %22 = vector.load %arg6[%c0_13, %c0_14] : memref<8x1xf32, #tpu.memory_space<vmem>>, vector<8x1xf32>
    %23 = arith.minimumf %22, %17 : vector<8x1xf32>
    %c0_15 = arith.constant 0 : index
    %c0_16 = arith.constant 0 : index
    %24 = vector.load %arg6[%c0_15, %c0_16] : memref<8x1xf32, #tpu.memory_space<vmem>>, vector<8x1xf32>
    tpu.vector_store %arg6[%c0_15, %c0_16], %23 {strides = array<i32>} : memref<8x1xf32, #tpu.memory_space<vmem>>, vector<8x1xf32>,
    %c0_17 = arith.constant 0 : index
    %c0_18 = arith.constant 0 : index
    %25 = vector.load %arg7[%c0_17, %c0_18] : memref<8x1xf32, #tpu.memory_space<vmem>>, vector<8x1xf32>
    %26 = arith.minimumf %25, %21 : vector<8x1xf32>
    %c0_19 = arith.constant 0 : index
    %c0_20 = arith.constant 0 : index
    %27 = vector.load %arg7[%c0_19, %c0_20] : memref<8x1xf32, #tpu.memory_space<vmem>>, vector<8x1xf32>
    tpu.vector_store %arg7[%c0_19, %c0_20], %26 {strides = array<i32>} : memref<8x1xf32, #tpu.memory_space<vmem>>, vector<8x1xf32>,
    return
  }
  func.func @transform_0(%arg0: i32, %arg1: i32) -> (i32, i32) {
    %c0_i32 = arith.constant 0 : i32
    %c0_i32_0 = arith.constant 0 : i32
    return %arg0, %c0_i32 : i32, i32
  }
  func.func @transform_1(%arg0: i32, %arg1: i32) -> (i32, i32) {
    %c0_i32 = arith.constant 0 : i32
    %c0_i32_0 = arith.constant 0 : i32
    return %arg1, %c0_i32 : i32, i32
  }
  func.func @transform_2(%arg0: i32, %arg1: i32) -> (i32, i32) {
    %c0_i32 = arith.constant 0 : i32
    %c0_i32_0 = arith.constant 0 : i32
    return %c0_i32, %arg1 : i32, i32
  }
  func.func @transform_3(%arg0: i32, %arg1: i32) -> (i32, i32) {
    %c0_i32 = arith.constant 0 : i32
    %c0_i32_0 = arith.constant 0 : i32
    return %arg0, %c0_i32 : i32, i32
  }
  func.func @transform_4(%arg0: i32, %arg1: i32) -> (i32, i32) {
    %c0_i32 = arith.constant 0 : i32
    %c0_i32_0 = arith.constant 0 : i32
    return %arg0, %c0_i32 : i32, i32
  }
  func.func @transform_5(%arg0: i32, %arg1: i32) -> (i32, i32) {
    %c0_i32 = arith.constant 0 : i32
    %c0_i32_0 = arith.constant 0 : i32
    return %arg0, %c0_i32 : i32, i32
  }
}

</mosaic_0001>

<llo_original>
// kernel: tpu_custom_call.1
$region0: #{tpu_custom_call.1}
  #allocation0 [shape = 'u32[]', space=smem, size = 0x4, offset = 0x4, fixed_abs, tag = 'smem constant byte address 0x4 - core index']
  #allocation1 [shape = 'u32[144,128]{1,0:T(1,128)}', space=vmem, size = 0x12000, scoped, tag = 'internal scratch']
  %s0 = inlined_call_operand.vmem [shape: f32[8,128], index: 0, kind: input, shape index: {}]
  %s1 = inlined_call_operand.hbm [shape: f32[128,128], index: 1, kind: input, shape index: {}]
  %s2 = inlined_call_operand.vmem [shape: f32[2,128], index: 2, kind: input, shape index: {}]
  %s3 = inlined_call_operand.vmem [shape: f32[8,1], index: 3, kind: input, shape index: {}]
  %s4 = inlined_call_operand.vmem [shape: f32[8,1], index: 4, kind: output, shape index: {0}]
  %s5 = inlined_call_operand.vmem [shape: f32[8,1], index: 5, kind: output, shape index: {1}]
  %6 = xla_tuple %s4, %s5
  %s7 = sld [smem:[#allocation0]]
  $region42: #{tpu_custom_call.1} parent=0
    _
  %s9 = ssub.s32 1, %s7
  %s10 = scalar_select 0, %s9, %s7
  $region1: #{tpu_custom_call.1} parent=0
    #allocation2 [shape = 'u8[65536]{0}', space=vmem, size = 0x10000, scoped, tag = 'input window, operand 1, single buffered']
    #allocation3 [shape = 's32[1]{0}', space=sflag, size = 0x4, scoped, tag = 'scoped memory for tpu_custom_call.1']
    %11 = vsyncpa [#allocation3], 0
    // Predicated region
    $region2: #{tpu_custom_call.1} parent=1 // pred_check
      _
    $region3: #{tpu_custom_call.1} parent=1 // pred_check_branch
      %13 = sbr.rel (0) target = $region5
    $region4: #{tpu_custom_call.1} parent=1 // pred_region
      _
    $region5: #{tpu_custom_call.1} parent=1 // pred_fallthru
      _
    // Predicated region
    $region6: #{tpu_custom_call.1} parent=1 // pred_check
      _
    $region7: #{tpu_custom_call.1} parent=1 // pred_check_branch
      %15 = sbr.rel (0) target = $region9
    $region8: #{tpu_custom_call.1} parent=1 // pred_region
      %s17 = ssub.s32 2048, 2048
      %18 = vsyncadd [#allocation3], %s17
      %s19 = sshll.u32 [#allocation2], 4
      %s20 = int_to_ptr.vmem [resolvable:$true] %s19
      %25 = dma.hbm_to_vmem [thread:$0]  %s1, 2048, %s20, [#allocation3], 128, 128, 8
    $region9: #{tpu_custom_call.1} parent=1 // pred_fallthru
      _
    // Predicated region
    $region10: #{tpu_custom_call.1} parent=1 // pred_check
      _
    $region11: #{tpu_custom_call.1} parent=1 // pred_check_branch
      %27 = sbr.rel (0) target = $region13
    $region12: #{tpu_custom_call.1} parent=1 // pred_region
      _
    $region13: #{tpu_custom_call.1} parent=1 // pred_fallthru
      _
    // Predicated region
    $region14: #{tpu_custom_call.1} parent=1 // pred_check
      _
    $region15: #{tpu_custom_call.1} parent=1 // pred_check_branch
      %29 = sbr.rel (0) target = $region17
    $region16: #{tpu_custom_call.1} parent=1 // pred_region
      _
    $region17: #{tpu_custom_call.1} parent=1 // pred_fallthru
      _
    // Predicated region
    $region18: #{tpu_custom_call.1} parent=1 // pred_check
      _
    $region19: #{tpu_custom_call.1} parent=1 // pred_check_branch
      %31 = sbr.rel (0) target = $region21
    $region20: #{tpu_custom_call.1} parent=1 // pred_region
      %32 = dma.done [#allocation3], 2048
    $region21: #{tpu_custom_call.1} parent=1 // pred_fallthru
      _
    %p33 = scmp.eq.s32.totalorder 0, 0
    // Predicated region
    $region22: #{tpu_custom_call.1} parent=1 // pred_check
      %p34 = pneg %p33
    $region23: #{tpu_custom_call.1} parent=1 // pred_check_branch
      %36 = sbr.rel (%p34) target = $region25
    $region24: #{tpu_custom_call.1} parent=1 // pred_region
      %vm37 = vcmask 7168
      %38 = vst.msk [vmem:[%s4] sm:$0xff] %vm37, 1e+30
      %39 = vst.msk [vmem:[%s5] sm:$0xff] %vm37, 1e+30
    $region25: #{tpu_custom_call.1} parent=1 // pred_fallthru
      _
    %v40 = vld [vmem:[%s0] sm:$0xff]
    %v41 = vld [vmem:[#allocation2] sm:$0xff]
    %v42 = vld [vmem:[#allocation2 + $0x8] sm:$0xff]
    %v43 = vld [vmem:[#allocation2 + $0x10] sm:$0xff]
    %v44 = vld [vmem:[#allocation2 + $0x18] sm:$0xff]
    %v45 = vld [vmem:[#allocation2 + $0x20] sm:$0xff]
    %v46 = vld [vmem:[#allocation2 + $0x28] sm:$0xff]
    %v47 = vld [vmem:[#allocation2 + $0x30] sm:$0xff]
    %v48 = vld [vmem:[#allocation2 + $0x38] sm:$0xff]
    %v49 = vld [vmem:[#allocation2 + $0x40] sm:$0xff]
    %v50 = vld [vmem:[#allocation2 + $0x48] sm:$0xff]
    %v51 = vld [vmem:[#allocation2 + $0x50] sm:$0xff]
    %v52 = vld [vmem:[#allocation2 + $0x58] sm:$0xff]
    %v53 = vld [vmem:[#allocation2 + $0x60] sm:$0xff]
    %v54 = vld [vmem:[#allocation2 + $0x68] sm:$0xff]
    %v55 = vld [vmem:[#allocation2 + $0x70] sm:$0xff]
    %v56 = vld [vmem:[#allocation2 + $0x78] sm:$0xff]
    %57 = vmatprep.subr.mxu0 0.0
    %58 = vmatpush1.xpose.msra.mxu0 %v41
    %59 = vmatprep.subr.mxu0 0.0
    %60 = vmatpush1.xpose.msra.mxu0 %v42
    %61 = vmatprep.subr.mxu0 0.0
    %62 = vmatpush1.xpose.msra.mxu0 %v43
    %63 = vmatprep.subr.mxu0 0.0
    %64 = vmatpush1.xpose.msra.mxu0 %v44
    %65 = vmatprep.subr.mxu0 0.0
    %66 = vmatpush1.xpose.msra.mxu0 %v45
    %67 = vmatprep.subr.mxu0 0.0
    %68 = vmatpush1.xpose.msra.mxu0 %v46
    %69 = vmatprep.subr.mxu0 0.0
    %70 = vmatpush1.xpose.msra.mxu0 %v47
    %71 = vmatprep.subr.mxu0 0.0
    %72 = vmatpush1.xpose.msra.mxu0 %v48
    %73 = vmatprep.subr.mxu0 0.0
    %74 = vmatpush1.xpose.msra.mxu0 %v49
    %75 = vmatprep.subr.mxu0 0.0
    %76 = vmatpush1.xpose.msra.mxu0 %v50
    %77 = vmatprep.subr.mxu0 0.0
    %78 = vmatpush1.xpose.msra.mxu0 %v51
    %79 = vmatprep.subr.mxu0 0.0
    %80 = vmatpush1.xpose.msra.mxu0 %v52
    %81 = vmatprep.subr.mxu0 0.0
    %82 = vmatpush1.xpose.msra.mxu0 %v53
    %83 = vmatprep.subr.mxu0 0.0
    %84 = vmatpush1.xpose.msra.mxu0 %v54
    %85 = vmatprep.subr.mxu0 0.0
    %86 = vmatpush1.xpose.msra.mxu0 %v55
    %87 = vmatprep.subr.mxu0 0.0
    %88 = vmatpush1.xpose.msra.mxu0 %v56
    %89 = vmatprep.subr.mxu0 0.0
    %90 = vmatpush1.xpose.msra.mxu0 0.0
    %91 = vmatprep.subr.mxu0 0.0
    %92 = vmatpush1.xpose.msra.mxu0 0.0
    %93 = vmatprep.subr.mxu0 0.0
    %94 = vmatpush1.xpose.msra.mxu0 0.0
    %95 = vmatprep.subr.mxu0 0.0
    %96 = vmatpush1.xpose.msra.mxu0 0.0
    %97 = vmatprep.subr.mxu0 0.0
    %98 = vmatpush1.xpose.msra.mxu0 0.0
    %99 = vmatprep.subr.mxu0 0.0
    %100 = vmatpush1.xpose.msra.mxu0 0.0
    %101 = vmatprep.subr.mxu0 0.0
    %102 = vmatpush1.xpose.msra.mxu0 0.0
    %103 = vmatprep.subr.mxu0 0.0
    %104 = vmatpush1.xpose.msra.mxu0 0.0
    %105 = vmatprep.subr.mxu0 0.0
    %106 = vmatpush1.xpose.msra.mxu0 0.0
    %107 = vmatprep.subr.mxu0 0.0
    %108 = vmatpush1.xpose.msra.mxu0 0.0
    %109 = vmatprep.subr.mxu0 0.0
    %110 = vmatpush1.xpose.msra.mxu0 0.0
    %111 = vmatprep.subr.mxu0 0.0
    %112 = vmatpush1.xpose.msra.mxu0 0.0
    %113 = vmatprep.subr.mxu0 0.0
    %114 = vmatpush1.xpose.msra.mxu0 0.0
    %115 = vmatprep.subr.mxu0 0.0
    %116 = vmatpush1.xpose.msra.mxu0 0.0
    %117 = vmatprep.subr.mxu0 0.0
    %118 = vmatpush1.xpose.msra.mxu0 0.0
    %119 = vmatprep.subr.mxu0 0.0
    %120 = vmatpush1.xpose.msra.mxu0 0.0
    %121 = vmatprep.mubr.f32.mxu0 0.0
    %122 = vmatmul.mubr.f32.gmra.mrb[0].mxu0 %v40
    %v123 = vpop.f32.mrb[0].mxu0
    %v124 = vadd.f32 0.0, %v123
    %v125 = vpop.f32.mrb[0].mxu0
    %126 = vdwg.mxu0
    %v127 = vld [vmem:[%s2] sm:$0x1]
    %v128 = vlaneseq
    %v129 = vshrl.u32 %v128, 7
    %v130 = vsub.s32 0, %v129
    %v131 = vrot.slane %v127, %v130
    %v132 = vsub.f32 %v131, %v124
    %v133 = vld [vmem:[%s2 + $0x1] sm:$0x1]
    %v134 = vld [vmem:[%s3] sm:$0xff]
    %v135 = vlaneseq
    %v136 = vshrl.u32 %v135, 7
    %v137 = vsub.s32 0, %v136
    %v138 = vrot.slane %v133, %v137
    %140 = vset.pattern.permute.xlu0 0
    %141 = vperm.xlu0 %140, %v134
    %v142 = vpop.permute.xlu0 %141
    %vm144 = vcmp.eq.f32.partialorder %v138, %v142
    %v145 = vsel %vm144, %v132, 1e+30
    %146 = vmin.xlane.f32.xlu0 %v145
    %v147 = vpop.xlane.xlu0 %146
    %v148 = vsel %vm144, 1e+30, %v132
    %149 = vmin.xlane.f32.xlu0 %v148
    %v150 = vpop.xlane.xlu0 %149
    %v151 = vld [vmem:[%s4] sm:$0xff]
    %v152 = vmin.f32 %v151, %v147
    %vm153 = vcmask 7168
    %154 = vst.msk [vmem:[%s4] sm:$0xff] %vm153, %v152
    %v155 = vld [vmem:[%s5] sm:$0xff]
    %v156 = vmin.f32 %v155, %v150
    %157 = vst.msk [vmem:[%s5] sm:$0xff] %vm153, %v156
    // Predicated region
    $region26: #{tpu_custom_call.1} parent=1 // pred_check
      _
    $region27: #{tpu_custom_call.1} parent=1 // pred_check_branch
      %159 = sbr.rel (0) target = $region29
    $region28: #{tpu_custom_call.1} parent=1 // pred_region
      _
    $region29: #{tpu_custom_call.1} parent=1 // pred_fallthru
      _
    // Predicated region
    $region30: #{tpu_custom_call.1} parent=1 // pred_check
      _
    $region31: #{tpu_custom_call.1} parent=1 // pred_check_branch
      %161 = sbr.rel (0) target = $region33
    $region32: #{tpu_custom_call.1} parent=1 // pred_region
      _
    $region33: #{tpu_custom_call.1} parent=1 // pred_fallthru
      _
    // Predicated region
    $region34: #{tpu_custom_call.1} parent=1 // pred_check
      _
    $region35: #{tpu_custom_call.1} parent=1 // pred_check_branch
      %163 = sbr.rel (0) target = $region37
    $region36: #{tpu_custom_call.1} parent=1 // pred_region
      _
    $region37: #{tpu_custom_call.1} parent=1 // pred_fallthru
      _
    // Predicated region
    $region38: #{tpu_custom_call.1} parent=1 // pred_check
      _
    $region39: #{tpu_custom_call.1} parent=1 // pred_check_branch
      %165 = sbr.rel (0) target = $region41
    $region40: #{tpu_custom_call.1} parent=1 // pred_region
      _
    $region41: #{tpu_custom_call.1} parent=1 // pred_fallthru
      _
    %166 = vsyncpa [#allocation3], 1

</llo_original>
